<compile_context>
chip_gen: v7x
topology: tpu7x:2x2x1
jax: 0.10.0
libtpu: 0.0.40
codegen_flags: <defaults>
</compile_context>

<pallas_src>
import functools

import jax
import jax.numpy as jnp
from jax.experimental import pallas as pl
from jax.experimental.pallas import tpu as pltpu

_EPS = 0.001


def _vmem_budgets():
    """Returns (input_tile_budget_bytes, vmem_limit_bytes), generation aware.

    Peak VMEM ~= 2 * (input tiles + equal-size output tile) * double-buffer
    ~= 4x the input budget, so budgets are chosen to keep that well inside the
    per-core VMEM (128 MiB on v5e/v6e, 64 MiB on v7x)."""
    try:
        cap = int(pltpu.get_tpu_info().vmem_capacity_bytes)
    except Exception:
        cap = 64 * 1024 * 1024  # conservative (v7x-sized) default
    if cap >= 100 * 1024 * 1024:          # v5e / v6e: 128 MiB VMEM
        return 12 * 1024 * 1024, 96 * 1024 * 1024
    return 8 * 1024 * 1024, 44 * 1024 * 1024   # v7x: 64 MiB VMEM


def _choose_tile_hw(hw, c_total, itemsize, n_batch, budget_bytes):
    """Lane tile: multiple of 128, sized to the input-tile VMEM budget.

    Works for any hw (cdiv grid + Pallas tail masking); also guarantees >= 2
    parallel grid steps when the batch axis alone cannot (v7x megacore)."""
    hw_blocks = -(-hw // 128)                                    # ceil(hw/128)
    max_blocks = max(budget_bytes // (itemsize * max(c_total, 1) * 128), 1)
    tile_blocks = max(1, min(hw_blocks, max_blocks))
    if n_batch == 1 and tile_blocks >= hw_blocks and hw_blocks >= 2:
        tile_blocks = -(-hw_blocks // 2)                         # split HW in 2
    return tile_blocks * 128


def _cat_bn_act_kernel(n_in, *refs):
    """refs = (*x_refs, scale_ref, shift_ref, o_ref).

    x_refs[k]: (1, Ck, tile_hw) block of input k.
    scale/shift: (1, C_total, 1) folded BN affine (f32), lane-broadcast.
    o_ref: (1, C_total, tile_hw) output block -- ONE dense full-block store.
    """
    x_refs = refs[:n_in]
    scale_ref, shift_ref, o_ref = refs[n_in], refs[n_in + 1], refs[n_in + 2]
    parts = [r[...].astype(jnp.float32) for r in x_refs]
    x_cat = parts[0] if n_in == 1 else jnp.concatenate(parts, axis=1)
    y = x_cat * scale_ref[...] + shift_ref[...]
    o_ref[...] = jnp.maximum(y, 0.0).astype(o_ref.dtype)


@functools.partial(jax.jit, static_argnames=("tile_hw", "vmem_limit"))
def _cat_bn_act_call(xs, scale, shift, *, tile_hw, vmem_limit):
    n, _, hw = xs[0].shape
    chans = tuple(int(v.shape[1]) for v in xs)
    c_total = sum(chans)

    grid = (n, pl.cdiv(hw, tile_hw))
    in_specs = [pl.BlockSpec((1, c, tile_hw), lambda i, j: (i, 0, j))
                for c in chans]
    param_spec = pl.BlockSpec((1, c_total, 1), lambda i, j: (0, 0, 0))
    in_specs += [param_spec, param_spec]
    out_specs = pl.BlockSpec((1, c_total, tile_hw), lambda i, j: (i, 0, j))

    return pl.pallas_call(
        functools.partial(_cat_bn_act_kernel, len(xs)),
        out_shape=jax.ShapeDtypeStruct((n, c_total, hw), xs[0].dtype),
        grid_spec=pltpu.PrefetchScalarGridSpec(
            num_scalar_prefetch=0,
            grid=grid,
            in_specs=in_specs,
            out_specs=out_specs,
        ),
        compiler_params=pltpu.CompilerParams(
            dimension_semantics=("parallel", "parallel"),
            vmem_limit_bytes=vmem_limit,
        ),
    )(*xs, scale, shift)


def cat_bn_act(x, gamma, beta, running_mean, running_var):
    """x: tuple/list of NCHW arrays or a single NCHW array. Returns NCHW output."""
    xs = list(x) if isinstance(x, (tuple, list)) else [x]
    n, _, h, w = xs[0].shape
    hw = h * w
    # NCHW -> (N, C, H*W): contiguous reshape, no data movement.
    xs3 = tuple(v.reshape(v.shape[0], v.shape[1], hw) for v in xs)
    c_total = sum(v.shape[1] for v in xs3)

    # Fold BN into a single per-channel affine (computed once, O(C)).
    scale = gamma.astype(jnp.float32) * jax.lax.rsqrt(
        running_var.astype(jnp.float32) + _EPS)
    shift = beta.astype(jnp.float32) - running_mean.astype(jnp.float32) * scale
    scale3 = scale.reshape(1, c_total, 1)
    shift3 = shift.reshape(1, c_total, 1)

    budget, vmem_limit = _vmem_budgets()
    tile_hw = _choose_tile_hw(
        hw, c_total, jnp.dtype(xs3[0].dtype).itemsize, n, budget)
    # TODO(synk): add a channel-block grid axis (blocking scale/shift too) for
    # multi-thousand-channel concats so tile_hw never shrinks below ~512.
    out = _cat_bn_act_call(xs3, scale3, shift3,
                           tile_hw=tile_hw, vmem_limit=vmem_limit)
    return out.reshape(n, c_total, h, w)


if __name__ == "__main__":
    key = jax.random.PRNGKey(0)
    k1, k2 = jax.random.split(key)

    # Two feature maps concatenated along channels: (2, 4, 16, 16) each -> C=8.
    xa = jax.random.normal(k1, (2, 4, 16, 16), dtype=jnp.float32)
    xb = jax.random.normal(k2, (2, 4, 16, 16), dtype=jnp.float32)
    in_chs = 8

    # Deterministic synthetic BN parameters (shapes from nn.BatchNorm2d(in_chs)).
    gamma = 1.0 + 0.1 * jnp.arange(in_chs, dtype=jnp.float32)
    beta = 0.05 * jnp.arange(in_chs, dtype=jnp.float32) - 0.2
    running_mean = 0.02 * jnp.arange(in_chs, dtype=jnp.float32)
    running_var = 1.0 + 0.03 * jnp.arange(in_chs, dtype=jnp.float32)

    out = cat_bn_act((xa, xb), gamma, beta, running_mean, running_var)
    out = jax.block_until_ready(out)

    # Pure-JAX reference check (inference BatchNorm + ReLU on the concat).
    x_cat = jnp.concatenate((xa, xb), axis=1)
    ref_scale = gamma / jnp.sqrt(running_var + _EPS)
    ref = jnp.maximum(
        (x_cat - running_mean[None, :, None, None]) * ref_scale[None, :, None, None]
        + beta[None, :, None, None], 0.0)
    assert out.shape == (2, 8, 16, 16)
    assert jnp.allclose(out, ref, atol=1e-5, rtol=1e-5)

    print("KERNEL_OK")
</pallas_src>

<mosaic_0001>
module attributes {stable_mosaic.version = 11 : i64} {
  func.func @_cat_bn_act_kernel(%arg0: i32, %arg1: i32, %arg2: memref<1x4x256xf32, #tpu.memory_space<vmem>>, %arg3: memref<1x4x256xf32, #tpu.memory_space<vmem>>, %arg4: memref<1x8x1xf32, #tpu.memory_space<vmem>>, %arg5: memref<1x8x1xf32, #tpu.memory_space<vmem>>, %arg6: memref<1x8x256xf32, #tpu.memory_space<vmem>>) attributes {dimension_semantics = [#tpu.dimension_semantics<parallel>, #tpu.dimension_semantics<parallel>], iteration_bounds = array<i64: 2, 1>, scalar_prefetch = 0 : i64, scratch_operands = 0 : i64, tpu.core_type = #tpu.core_type<tc>, window_params = [{transform_indices = @transform_0, window_bounds = array<i64: 1, 4, 256>}, {transform_indices = @transform_1, window_bounds = array<i64: 1, 4, 256>}, {pipeline_mode = #tpu.pipeline_mode<synchronous>, transform_indices = @transform_2, window_bounds = array<i64: 1, 8, 1>}, {pipeline_mode = #tpu.pipeline_mode<synchronous>, transform_indices = @transform_3, window_bounds = array<i64: 1, 8, 1>}, {transform_indices = @transform_4, window_bounds = array<i64: 1, 8, 256>}]} {
    %c0 = arith.constant 0 : index
    %c0_0 = arith.constant 0 : index
    %c0_1 = arith.constant 0 : index
    %0 = vector.load %arg2[%c0, %c0_0, %c0_1] : memref<1x4x256xf32, #tpu.memory_space<vmem>>, vector<1x4x256xf32>
    %c0_2 = arith.constant 0 : index
    %c0_3 = arith.constant 0 : index
    %c0_4 = arith.constant 0 : index
    %1 = vector.load %arg3[%c0_2, %c0_3, %c0_4] : memref<1x4x256xf32, #tpu.memory_space<vmem>>, vector<1x4x256xf32>
    %2 = tpu.concatenate %0, %1 in 1 : vector<1x4x256xf32>, vector<1x4x256xf32> -> vector<1x8x256xf32>
    %c0_5 = arith.constant 0 : index
    %c0_6 = arith.constant 0 : index
    %c0_7 = arith.constant 0 : index
    %3 = vector.load %arg4[%c0_5, %c0_6, %c0_7] : memref<1x8x1xf32, #tpu.memory_space<vmem>>, vector<1x8x1xf32>
    %4 = vector.broadcast %3 : vector<1x8x1xf32> to vector<1x8x256xf32>
    %5 = arith.mulf %2, %4 : vector<1x8x256xf32>
    %c0_8 = arith.constant 0 : index
    %c0_9 = arith.constant 0 : index
    %c0_10 = arith.constant 0 : index
    %6 = vector.load %arg5[%c0_8, %c0_9, %c0_10] : memref<1x8x1xf32, #tpu.memory_space<vmem>>, vector<1x8x1xf32>
    %7 = vector.broadcast %6 : vector<1x8x1xf32> to vector<1x8x256xf32>
    %8 = arith.addf %5, %7 : vector<1x8x256xf32>
    %cst = arith.constant 0.000000e+00 : f32
    %9 = vector.broadcast %cst : f32 to vector<1x8x256xf32>
    %10 = arith.maximumf %8, %9 : vector<1x8x256xf32>
    %c0_11 = arith.constant 0 : index
    %c0_12 = arith.constant 0 : index
    %c0_13 = arith.constant 0 : index
    %11 = vector.load %arg6[%c0_11, %c0_12, %c0_13] : memref<1x8x256xf32, #tpu.memory_space<vmem>>, vector<1x8x256xf32>
    tpu.vector_store %arg6[%c0_11, %c0_12, %c0_13], %10 {strides = array<i32>} : memref<1x8x256xf32, #tpu.memory_space<vmem>>, vector<1x8x256xf32>,
    return
  }
  func.func @transform_0(%arg0: i32, %arg1: i32) -> (i32, i32, i32) {
    %c0_i32 = arith.constant 0 : i32
    %c0_i32_0 = arith.constant 0 : i32
    return %arg0, %c0_i32, %arg1 : i32, i32, i32
  }
  func.func @transform_1(%arg0: i32, %arg1: i32) -> (i32, i32, i32) {
    %c0_i32 = arith.constant 0 : i32
    %c0_i32_0 = arith.constant 0 : i32
    return %arg0, %c0_i32, %arg1 : i32, i32, i32
  }
  func.func @transform_2(%arg0: i32, %arg1: i32) -> (i32, i32, i32) {
    %c0_i32 = arith.constant 0 : i32
    %c0_i32_0 = arith.constant 0 : i32
    %c0_i32_1 = arith.constant 0 : i32
    %c0_i32_2 = arith.constant 0 : i32
    return %c0_i32, %c0_i32_0, %c0_i32_1 : i32, i32, i32
  }
  func.func @transform_3(%arg0: i32, %arg1: i32) -> (i32, i32, i32) {
    %c0_i32 = arith.constant 0 : i32
    %c0_i32_0 = arith.constant 0 : i32
    %c0_i32_1 = arith.constant 0 : i32
    %c0_i32_2 = arith.constant 0 : i32
    return %c0_i32, %c0_i32_0, %c0_i32_1 : i32, i32, i32
  }
  func.func @transform_4(%arg0: i32, %arg1: i32) -> (i32, i32, i32) {
    %c0_i32 = arith.constant 0 : i32
    %c0_i32_0 = arith.constant 0 : i32
    return %arg0, %c0_i32, %arg1 : i32, i32, i32
  }
}

</mosaic_0001>

<llo_original>
// kernel: _cat_bn_act_call.1
$region0: #{_cat_bn_act_call.1}
  #allocation0 [shape = 'u32[]', space=smem, size = 0x4, offset = 0x4, fixed_abs, tag = 'smem constant byte address 0x4 - core index']
  #allocation1 [shape = 'u32[144,128]{1,0:T(1,128)}', space=vmem, size = 0x12000, scoped, tag = 'internal scratch']
  %s0 = inlined_call_operand.vmem [shape: f32[2,4,256], index: 0, kind: input, shape index: {}]
  %s1 = inlined_call_operand.hbm [shape: f32[2,4,256], index: 1, kind: input, shape index: {}]
  %s2 = inlined_call_operand.vmem [shape: f32[1,8,1], index: 2, kind: input, shape index: {}]
  %s3 = inlined_call_operand.vmem [shape: f32[1,8,1], index: 3, kind: input, shape index: {}]
  %s4 = inlined_call_operand.hbm [shape: f32[2,8,256], index: 4, kind: output, shape index: {}]
  %s5 = sld [smem:[#allocation0]]
  $region53: #{_cat_bn_act_call.1} parent=0
    _
  %s7 = ssub.s32 1, %s5
  %s8 = scalar_select 0, %s7, %s5
  $region1: #{_cat_bn_act_call.1} parent=0
    #allocation2 [shape = 'u8[8192]{0}', space=vmem, size = 0x2000, scoped, tag = 'input window, operand 1']
    #allocation3 [shape = 's32[2]{0}', space=sflag, size = 0x8, scoped, tag = 'scoped memory for _cat_bn_act_call.1']
    #allocation4 [shape = 's32[2]{0}', space=sflag, size = 0x8, scoped, tag = 'scoped memory for _cat_bn_act_call.1']
    #allocation5 [shape = 'u8[16384]{0}', space=vmem, size = 0x4000, scoped, tag = 'output window, operand 0']
    %9 = vsyncpa [#allocation3], 0
    %s10 = scalar_lea.sflag [#allocation3], 1
    %11 = vsyncpa %s10, 0
    %12 = vsyncpa [#allocation4], 0
    %s13 = scalar_lea.sflag [#allocation4], 1
    %14 = vsyncpa %s13, 0
    loop: start=0, step=1, limit=4
    $region2: #{_cat_bn_act_call.1} parent=1 // loop_pre_header
      _
    $region3: #{_cat_bn_act_call.1} parent=1 // loop_header
      %s16 = sphi 0, %s20
      %p17 = scmp.ge.s32.totalorder %s16, 4
      %s23 = sphi 0, %s35
      %s24 = sphi 0, %s31
      %s25 = sphi 0, %s23
      %s26 = sphi 0, %s24
      %s27 = sphi 0, %s25
      %s28 = sphi 0, %s26
      %s40 = sphi 0, %s42
      %s43 = sphi 0, %s40
      %s44 = sphi 0, %s43
      %s60 = sphi 0, %s44
      %s68 = sphi 0, %s70
      %s71 = sphi 0, %s68
      %s72 = sphi 0, %s71
      %s88 = sphi 0, %s72
      %s92 = sphi 0, %s92
      %s94 = sphi 0, %s92
      %s95 = sphi 0, %s94
      %s109 = sphi 0, %s95
      %s113 = sphi 0, %s113
      %s115 = sphi 0, %s113
      %s116 = sphi 0, %s115
      %s130 = sphi 0, %s116
      %s138 = sphi 0, %s140
      %s141 = sphi 0, %s138
      %s142 = sphi 0, %s141
      %s158 = sphi 0, %s142
    $region4: #{_cat_bn_act_call.1} parent=1 // loop_header_branch
      %19 = sbr.rel (%p17) target = $region8
    $region5: #{_cat_bn_act_call.1} parent=1 // loop_body
      %s21 = ssub.s32 %s16, 1
      %s22 = ssub.s32 %s16, 2
      %s29 = sadd.s32 1, %s24
      %p30 = scmp.ge.s32.totalorder %s29, 1
      %s31 = scalar_select %p30, 0, %s29
      %s32 = sadd.s32 1, %s23
      %s33 = scalar_select %p30, %s32, %s23
      %p34 = scmp.ge.s32.totalorder %s33, 2
      %s35 = scalar_select %p34, 0, %s33
      %s36 = ssub.s32 %s23, %s35
      %s37 = ssub.s32 %s24, %s31
      %s38 = sor.u32 %s36, %s37
      %p39 = scmp.eq.s32.totalorder %s38, 0
      %s41 = sadd.s32 %s40, 1
      %s42 = scalar_select %p39, %s40, %s41
      %p45 = pneg %p39
      %p46 = scmp.eq.s32.totalorder %s16, 1
      %p47 = por %p45, %p46
      %p48 = scmp.ne.s32.totalorder %s40, %s43
      %p49 = scmp.eq.s32.totalorder %s16, 0
      %p50 = por %p48, %p49
      %p51 = scmp.ne.s32.totalorder %s40, %s43
      %p52 = scmp.eq.s32.totalorder %s21, 1
      %p53 = por %p51, %p52
      %p54 = scmp.ne.s32.totalorder %s43, %s44
      %p55 = scmp.eq.s32.totalorder %s21, 0
      %p56 = por %p54, %p55
      %p57 = scmp.ne.s32.totalorder %s43, %s44
      %p58 = scmp.eq.s32.totalorder %s22, 1
      %p59 = por %p57, %p58
      %p61 = scmp.ne.s32.totalorder %s44, %s60
      %p62 = scmp.eq.s32.totalorder %s22, 0
      %p63 = por %p61, %p62
      %s64 = ssub.s32 %s23, %s35
      %s65 = ssub.s32 %s24, %s31
      %s66 = sor.u32 %s64, %s65
      %p67 = scmp.eq.s32.totalorder %s66, 0
      %s69 = sadd.s32 %s68, 1
      %s70 = scalar_select %p67, %s68, %s69
      %p73 = pneg %p67
      %p74 = scmp.eq.s32.totalorder %s16, 1
      %p75 = por %p73, %p74
      %p76 = scmp.ne.s32.totalorder %s68, %s71
      %p77 = scmp.eq.s32.totalorder %s16, 0
      %p78 = por %p76, %p77
      %p79 = scmp.ne.s32.totalorder %s68, %s71
      %p80 = scmp.eq.s32.totalorder %s21, 1
      %p81 = por %p79, %p80
      %p82 = scmp.ne.s32.totalorder %s71, %s72
      %p83 = scmp.eq.s32.totalorder %s21, 0
      %p84 = por %p82, %p83
      %p85 = scmp.ne.s32.totalorder %s71, %s72
      %p86 = scmp.eq.s32.totalorder %s22, 1
      %p87 = por %p85, %p86
      %p89 = scmp.ne.s32.totalorder %s72, %s88
      %p90 = scmp.eq.s32.totalorder %s22, 0
      %p91 = por %p89, %p90
      %s93 = sadd.s32 %s92, 1
      %p96 = scmp.eq.s32.totalorder %s16, 1
      %p97 = scmp.ne.s32.totalorder %s92, %s94
      %p98 = scmp.eq.s32.totalorder %s16, 0
      %p99 = por %p97, %p98
      %p100 = scmp.ne.s32.totalorder %s92, %s94
      %p101 = scmp.eq.s32.totalorder %s21, 1
      %p102 = por %p100, %p101
      %p103 = scmp.ne.s32.totalorder %s94, %s95
      %p104 = scmp.eq.s32.totalorder %s21, 0
      %p105 = por %p103, %p104
      %p106 = scmp.ne.s32.totalorder %s94, %s95
      %p107 = scmp.eq.s32.totalorder %s22, 1
      %p108 = por %p106, %p107
      %p110 = scmp.ne.s32.totalorder %s95, %s109
      %p111 = scmp.eq.s32.totalorder %s22, 0
      %p112 = por %p110, %p111
      %s114 = sadd.s32 %s113, 1
      %p117 = scmp.eq.s32.totalorder %s16, 1
      %p118 = scmp.ne.s32.totalorder %s113, %s115
      %p119 = scmp.eq.s32.totalorder %s16, 0
      %p120 = por %p118, %p119
      %p121 = scmp.ne.s32.totalorder %s113, %s115
      %p122 = scmp.eq.s32.totalorder %s21, 1
      %p123 = por %p121, %p122
      %p124 = scmp.ne.s32.totalorder %s115, %s116
      %p125 = scmp.eq.s32.totalorder %s21, 0
      %p126 = por %p124, %p125
      %p127 = scmp.ne.s32.totalorder %s115, %s116
      %p128 = scmp.eq.s32.totalorder %s22, 1
      %p129 = por %p127, %p128
      %p131 = scmp.ne.s32.totalorder %s116, %s130
      %p132 = scmp.eq.s32.totalorder %s22, 0
      %p133 = por %p131, %p132
      %s134 = ssub.s32 %s23, %s35
      %s135 = ssub.s32 %s24, %s31
      %s136 = sor.u32 %s134, %s135
      %p137 = scmp.eq.s32.totalorder %s136, 0
      %s139 = sadd.s32 %s138, 1
      %s140 = scalar_select %p137, %s138, %s139
      %p143 = pneg %p137
      %p144 = scmp.eq.s32.totalorder %s16, 1
      %p145 = por %p143, %p144
      %p146 = scmp.ne.s32.totalorder %s138, %s141
      %p147 = scmp.eq.s32.totalorder %s16, 0
      %p148 = por %p146, %p147
      %p149 = scmp.ne.s32.totalorder %s138, %s141
      %p150 = scmp.eq.s32.totalorder %s21, 1
      %p151 = por %p149, %p150
      %p152 = scmp.ne.s32.totalorder %s141, %s142
      %p153 = scmp.eq.s32.totalorder %s21, 0
      %p154 = por %p152, %p153
      %p155 = scmp.ne.s32.totalorder %s141, %s142
      %p156 = scmp.eq.s32.totalorder %s22, 1
      %p157 = por %p155, %p156
      %p159 = scmp.ne.s32.totalorder %s142, %s158
      %p160 = scmp.eq.s32.totalorder %s22, 0
      %p161 = por %p159, %p160
      %p162 = scmp.le.s32.totalorder 1, %s16
      %p163 = scmp.lt.s32.totalorder %s16, 3
      %p164 = pnand %p162, %p163
      %p165 = pneg %p164
      // Predicated region
      $region9: #{_cat_bn_act_call.1} parent=5 // pred_check
        _
      $region10: #{_cat_bn_act_call.1} parent=5 // pred_check_branch
        %167 = sbr.rel (%p164) target = $region12
      $region11: #{_cat_bn_act_call.1} parent=5 // pred_region
        %s168 = ssub.s32 %s16, 1
        // Predicated region
        $region13: #{_cat_bn_act_call.1} parent=11 // pred_check
          %p169 = pneg %p105
        $region14: #{_cat_bn_act_call.1} parent=11 // pred_check_branch
          %171 = sbr.rel (%p169) target = $region16
        $region15: #{_cat_bn_act_call.1} parent=11 // pred_region
          _
        $region16: #{_cat_bn_act_call.1} parent=11 // pred_fallthru
          _
        // Predicated region
        $region17: #{_cat_bn_act_call.1} parent=11 // pred_check
          %p172 = pneg %p126
        $region18: #{_cat_bn_act_call.1} parent=11 // pred_check_branch
          %174 = sbr.rel (%p172) target = $region20
        $region19: #{_cat_bn_act_call.1} parent=11 // pred_region
          _
        $region20: #{_cat_bn_act_call.1} parent=11 // pred_fallthru
          _
      $region12: #{_cat_bn_act_call.1} parent=5 // pred_fallthru
        _
      %p175 = scmp.lt.s32.totalorder %s16, 2
      // Predicated region
      $region21: #{_cat_bn_act_call.1} parent=5 // pred_check
        %p176 = pneg %p175
      $region22: #{_cat_bn_act_call.1} parent=5 // pred_check_branch
        %178 = sbr.rel (%p176) target = $region24
      $region23: #{_cat_bn_act_call.1} parent=5 // pred_region
        // Predicated region
        $region25: #{_cat_bn_act_call.1} parent=23 // pred_check
          %p179 = pneg %p50
        $region26: #{_cat_bn_act_call.1} parent=23 // pred_check_branch
          %181 = sbr.rel (%p179) target = $region28
        $region27: #{_cat_bn_act_call.1} parent=23 // pred_region
          %s182 = smul.u32 2, %s24
          %p183 = scmp.lt.s32.totalorder %s23, 1
          %s184 = scalar_select %p183, %s23, 1
          %p185 = scmp.lt.s32.totalorder %s182, 1
          %s186 = scalar_select %p185, %s182, 1
          %s187 = smul.addr %s184, 2
          %s188 = sadd.s32 %s186, %s187
          %s189 = smul.addr %s188, 4
          %s190 = scalar_lea.vmem %s0, %s189
          %s191 = smul.u32 2, %s24
        $region28: #{_cat_bn_act_call.1} parent=23 // pred_fallthru
          _
        // Predicated region
        $region29: #{_cat_bn_act_call.1} parent=23 // pred_check
          %p192 = pneg %p78
        $region30: #{_cat_bn_act_call.1} parent=23 // pred_check_branch
          %194 = sbr.rel (%p192) target = $region32
        $region31: #{_cat_bn_act_call.1} parent=23 // pred_region
          %s195 = sand.u32 %s68, 1
          %s196 = scalar_lea.sflag [#allocation3], %s195
          %s197 = sand.u32 %s68, 1
          %s198 = smul.addr %s197, 8
          %s199 = scalar_lea.vmem [#allocation2], %s198
          %s200 = smul.u32 2, %s24
          %s202 = ssub.s32 128, 128
          %203 = vsyncadd %s196, %s202
          %s204 = smul.addr %s23, 2
          %s205 = sadd.s32 %s200, %s204
          %s206 = smul.addr %s205, 64
          %s207 = scalar_lea.hbm %s1, %s206
          %s209 = sshll.u32 %s199, 4
          %s210 = int_to_ptr.vmem [resolvable:$true] %s209
          %212 = dma.hbm_to_vmem [thread:$0]  %s207, 128, %s210, %s196
        $region32: #{_cat_bn_act_call.1} parent=23 // pred_fallthru
          _
      $region24: #{_cat_bn_act_call.1} parent=5 // pred_fallthru
        _
      %p213 = scmp.le.s32.totalorder 1, %s16
      %p214 = scmp.lt.s32.totalorder %s16, 3
      %p215 = pnand %p213, %p214
      %p216 = pneg %p215
      // Predicated region
      $region33: #{_cat_bn_act_call.1} parent=5 // pred_check
        _
      $region34: #{_cat_bn_act_call.1} parent=5 // pred_check_branch
        %218 = sbr.rel (%p215) target = $region36
      $region35: #{_cat_bn_act_call.1} parent=5 // pred_region
        %s219 = ssub.s32 %s16, 1
        %s220 = sand.u32 %s71, 1
        %s221 = scalar_lea.sflag [#allocation3], %s220
        %s222 = sand.u32 %s71, 1
        %s223 = smul.addr %s222, 8
        %s224 = scalar_lea.vmem [#allocation2], %s223
        // Predicated region
        $region37: #{_cat_bn_act_call.1} parent=35 // pred_check
          %p225 = pneg %p84
        $region38: #{_cat_bn_act_call.1} parent=35 // pred_check_branch
          %227 = sbr.rel (%p225) target = $region40
        $region39: #{_cat_bn_act_call.1} parent=35 // pred_region
          %228 = dma.done %s221, 128
        $region40: #{_cat_bn_act_call.1} parent=35 // pred_fallthru
          _
        %s229 = smul.u32 2, %s26
        %p230 = scmp.lt.s32.totalorder %s25, 1
        %s231 = scalar_select %p230, %s25, 1
        %p232 = scmp.lt.s32.totalorder %s229, 1
        %s233 = scalar_select %p232, %s229, 1
        %s234 = smul.addr %s231, 2
        %s235 = sadd.s32 %s233, %s234
        %s236 = smul.addr %s235, 4
        %s237 = scalar_lea.vmem %s0, %s236
        %p238 = pneg %p56
        %p239 = pneg %p53
        %s240 = sand.u32 %s71, 1
        %s241 = scalar_lea.sflag [#allocation3], %s240
        %s242 = sand.u32 %s71, 1
        %s243 = smul.addr %s242, 8
        %s244 = scalar_lea.vmem [#allocation2], %s243
        %p245 = pneg %p84
        %p246 = pneg %p81
        %p247 = pneg %p105
        %p248 = pneg %p102
        %p249 = pneg %p126
        %p250 = pneg %p123
        %p251 = pneg %p154
        %p252 = pneg %p151
        %s253 = sand.u32 %s141, 1
        %s254 = scalar_lea.sflag [#allocation4], %s253
        %s255 = sand.u32 %s141, 1
        %s256 = smul.addr %s255, 16
        %s257 = scalar_lea.vmem [#allocation5], %s256
        %s258 = smul.u32 2, %s26
        %p259 = scmp.lt.s32.totalorder %s25, 1
        %s260 = scalar_select %p259, %s25, 1
        %p261 = scmp.lt.s32.totalorder %s258, 1
        %s262 = scalar_select %p261, %s258, 1
        %s263 = smul.addr %s260, 2
        %s264 = sadd.s32 %s262, %s263
        %s265 = smul.addr %s264, 4
        %s266 = scalar_lea.vmem %s0, %s265
        %s267 = smul.u32 2, %s26
        %s268 = smul.u32 2, %s26
        %s269 = smul.u32 2, %s26
        %v270 = vld [vmem:[%s266] sm:$0xff]
        %v271 = vld [vmem:[%s224] sm:$0xff]
        %v273 = vcombine.high %v270, %v270
        %v276 = vcombine.low %v271, %v271
        %vm278 = vcmask 1043456
        %v279 = vsel %vm278, %v270, %v276
        %v280 = vsel %vm278, %v273, %v271
        %v281 = vld [vmem:[%s2] sm:$0xff]
        %283 = vset.pattern.permute.xlu0 0
        %284 = vperm.xlu0 %283, %v281
        %v285 = vpop.permute.xlu0 %284
        %v287 = vmul.f32 %v279, %v285
        %v288 = vmul.f32 %v280, %v285
        %v289 = vld [vmem:[%s3] sm:$0xff]
        %291 = vset.pattern.permute.xlu0 0
        %292 = vperm.xlu0 %291, %v289
        %v293 = vpop.permute.xlu0 %292
        %v295 = vadd.f32 %v287, %v293
        %v296 = vadd.f32 %v288, %v293
        %v297 = vmax.f32 %v295, 0.0
        %v298 = vmax.f32 %v296, 0.0
        %299 = vst [vmem:[%s257] sm:$0xff] %v297
        %300 = vst [vmem:[%s257 + $0x8] sm:$0xff] %v298
        %s301 = sand.u32 %s141, 1
        %s302 = scalar_lea.sflag [#allocation4], %s301
        %s303 = sand.u32 %s141, 1
        %s304 = smul.addr %s303, 16
        %s305 = scalar_lea.vmem [#allocation5], %s304
        // Predicated region
        $region41: #{_cat_bn_act_call.1} parent=35 // pred_check
          %p306 = pneg %p151
        $region42: #{_cat_bn_act_call.1} parent=35 // pred_check_branch
          %308 = sbr.rel (%p306) target = $region44
        $region43: #{_cat_bn_act_call.1} parent=35 // pred_region
          %s309 = smul.u32 2, %s26
          %s311 = ssub.s32 256, 256
          %312 = vsyncadd %s302, %s311
          %s313 = smul.addr %s25, 2
          %s314 = sadd.s32 %s309, %s313
          %s315 = smul.addr %s314, 128
          %s316 = scalar_lea.hbm %s4, %s315
          %s318 = sshll.u32 %s305, 4
          %s319 = int_to_ptr.vmem [resolvable:$true] %s318
          %321 = dma.vmem_to_hbm [thread:$0]  %s319, 256, %s316, %s302
        $region44: #{_cat_bn_act_call.1} parent=35 // pred_fallthru
          _
      $region36: #{_cat_bn_act_call.1} parent=5 // pred_fallthru
        _
      %p322 = scmp.le.s32.totalorder 2, %s16
      // Predicated region
      $region45: #{_cat_bn_act_call.1} parent=5 // pred_check
        %p323 = pneg %p322
      $region46: #{_cat_bn_act_call.1} parent=5 // pred_check_branch
        %325 = sbr.rel (%p323) target = $region48
      $region47: #{_cat_bn_act_call.1} parent=5 // pred_region
        %s326 = ssub.s32 %s16, 2
        // Predicated region
        $region49: #{_cat_bn_act_call.1} parent=47 // pred_check
          %p327 = pneg %p157
        $region50: #{_cat_bn_act_call.1} parent=47 // pred_check_branch
          %329 = sbr.rel (%p327) target = $region52
        $region51: #{_cat_bn_act_call.1} parent=47 // pred_region
          %s330 = sand.u32 %s142, 1
          %s331 = scalar_lea.sflag [#allocation4], %s330
          %s332 = sand.u32 %s142, 1
          %s333 = smul.addr %s332, 16
          %s334 = scalar_lea.vmem [#allocation5], %s333
          %335 = dma.done %s331, 256
        $region52: #{_cat_bn_act_call.1} parent=47 // pred_fallthru
          _
      $region48: #{_cat_bn_act_call.1} parent=5 // pred_fallthru
        _
    $region6: #{_cat_bn_act_call.1} parent=1 // loop_footer
      %s20 = sadd.s32 1, %s16
    $region7: #{_cat_bn_act_call.1} parent=1 // loop_footer_branch
      %15 = sbr.rel target = $region3
    $region8: #{_cat_bn_act_call.1} parent=1 // loop_exit
      _
    %336 = vsyncpa [#allocation3], 1
    %s337 = scalar_lea.sflag [#allocation3], 1
    %338 = vsyncpa %s337, 1
    %339 = vsyncpa [#allocation4], 1
    %s340 = scalar_lea.sflag [#allocation4], 1
    %341 = vsyncpa %s340, 1

</llo_original>
